<compile_context>
chip_gen: v7x
topology: tpu7x:2x2x1
jax: 0.10.0
libtpu: 0.0.40
codegen_flags: <defaults>
</compile_context>

<pallas_src>
import functools

import jax
import jax.numpy as jnp
from jax.experimental import pallas as pl
from jax.experimental.pallas import tpu as pltpu

EPS = 1e-5  # nn.BatchNorm2d default eps


def _largest_divisor_tile(dim, unit, max_tile):
    """Largest t <= max_tile with t % unit == 0 and dim % t == 0; else full dim."""
    if dim <= max_tile:
        return dim
    best = None
    t = unit
    while t <= max_tile:
        if dim % t == 0:
            best = t
        t += unit
    return best if best is not None else dim  # full dim is always a legal block


def dsblock_kernel(x_ref, gw_ref, bw_ref, o_ref, sum_ref, sq_ref, *, count):
    """Fused BN(train stats) + per-channel scale.

    x_ref: (1, TC, THW)   gw_ref/bw_ref: (TC, 1)   o_ref: (1, TC, THW)
    sum_ref/sq_ref: (TC, 1) f32 per-channel accumulators (persist across grid).
    Grid = (channel_blocks, pass(2), N, HW_blocks).
    """
    p = pl.program_id(1)
    n = pl.program_id(2)
    hw = pl.program_id(3)

    @pl.when((p == 0) & (n == 0) & (hw == 0))
    def _init():
        sum_ref[...] = jnp.zeros_like(sum_ref)
        sq_ref[...] = jnp.zeros_like(sq_ref)

    x = x_ref[0].astype(jnp.float32)  # (TC, THW)

    @pl.when(p == 0)
    def _accumulate():
        sum_ref[...] += jnp.sum(x, axis=1, keepdims=True)
        sq_ref[...] += jnp.sum(x * x, axis=1, keepdims=True)

    @pl.when(p == 1)
    def _normalize():
        inv_count = jnp.float32(1.0 / count)
        mean = sum_ref[...] * inv_count                              # (TC, 1)
        var = jnp.maximum(sq_ref[...] * inv_count - mean * mean, 0.0)
        inv_std = jax.lax.rsqrt(var + EPS)
        a = inv_std * gw_ref[...]          # gamma * w / std
        c = bw_ref[...] - mean * a         # beta * w - mean * a
        o_ref[0] = (x * a + c).astype(o_ref.dtype)


def dsblock_forward(x_nchw, conv_w, gamma, beta):
    """DSBlock forward: BatchNorm2d (training-mode batch stats) then depthwise 1x1."""
    N, C, H, W = x_nchw.shape
    HW = H * W
    x3d = x_nchw.reshape(N, C, HW)  # free reshape, no extra HBM passes

    w = conv_w.reshape(C).astype(jnp.float32)          # (C,1,1,1) -> (C,)
    gw = (gamma.astype(jnp.float32) * w).reshape(C, 1)  # gamma * w
    bw = (beta.astype(jnp.float32) * w).reshape(C, 1)   # beta * w

    itemsize = jnp.dtype(x_nchw.dtype).itemsize
    c_unit = max(8, 32 // max(itemsize, 1))        # 8 f32 / 16 bf16 / 32 int8
    TC = _largest_divisor_tile(C, c_unit, 256)     # channel tile (sublanes)
    THW = _largest_divisor_tile(HW, 128, 2048)     # lane-dense spatial tile
    grid = (C // TC, 2, N, HW // THW)

    kernel = functools.partial(dsblock_kernel, count=float(N * HW))

    out3d = pl.pallas_call(
        kernel,
        out_shape=jax.ShapeDtypeStruct((N, C, HW), x_nchw.dtype),
        grid_spec=pltpu.PrefetchScalarGridSpec(
            num_scalar_prefetch=0,
            grid=grid,
            in_specs=[
                pl.BlockSpec((1, TC, THW), lambda cb, p, n, hw: (n, cb, hw)),
                pl.BlockSpec((TC, 1), lambda cb, p, n, hw: (cb, 0)),
                pl.BlockSpec((TC, 1), lambda cb, p, n, hw: (cb, 0)),
            ],
            # During pass 0 the output block index is pinned to (0, cb, 0) so no
            # unwritten tile is ever flushed; pass 1 walks every (n, hw) block
            # and fully overwrites it before write-back.
            out_specs=pl.BlockSpec(
                (1, TC, THW), lambda cb, p, n, hw: (n * p, cb, hw * p)
            ),
            scratch_shapes=[
                pltpu.VMEM((TC, 1), jnp.float32),  # per-channel sum
                pltpu.VMEM((TC, 1), jnp.float32),  # per-channel sum of squares
            ],
        ),
        compiler_params=pltpu.CompilerParams(
            dimension_semantics=("parallel", "arbitrary", "arbitrary", "arbitrary"),
            vmem_limit_bytes=32 * 1024 * 1024,
        ),
    )(x3d, gw, bw)

    return out3d.reshape(N, C, H, W)


def dsblock_reference(x_nchw, conv_w, gamma, beta):
    # Pure-JAX reference (training-mode BN with biased batch stats + depthwise 1x1).
    x = x_nchw.astype(jnp.float32)
    mean = jnp.mean(x, axis=(0, 2, 3), keepdims=True)
    var = jnp.mean((x - mean) ** 2, axis=(0, 2, 3), keepdims=True)
    y = (x - mean) / jnp.sqrt(var + EPS)
    y = y * gamma.reshape(1, -1, 1, 1) + beta.reshape(1, -1, 1, 1)
    return y * conv_w.reshape(1, -1, 1, 1)


if __name__ == "__main__":
    key = jax.random.PRNGKey(0)

    # Primary small shape consistent with the module (in_channels == out_channels).
    N, C, H, W = 2, 4, 16, 16
    kx, kw = jax.random.split(key)
    x = jax.random.normal(kx, (N, C, H, W), dtype=jnp.float32)
    conv_w = jax.random.normal(kw, (C, 1, 1, 1), dtype=jnp.float32)  # depthwise 1x1
    gamma = jnp.ones((C,), dtype=jnp.float32)   # BN defaults
    beta = jnp.zeros((C,), dtype=jnp.float32)

    out = jax.block_until_ready(dsblock_forward(x, conv_w, gamma, beta))
    ref = dsblock_reference(x, conv_w, gamma, beta)
    assert out.shape == (N, C, H, W)
    assert jnp.allclose(out, ref, atol=2e-5, rtol=2e-5)

    # Second shape that exercises the tiled two-pass accumulation (HW > lane tile).
    N2, C2, H2, W2 = 2, 16, 64, 64
    k1, k2, k3, k4 = jax.random.split(key, 4)
    x2 = jax.random.normal(k1, (N2, C2, H2, W2), dtype=jnp.float32)
    w2 = jax.random.normal(k2, (C2, 1, 1, 1), dtype=jnp.float32)
    g2 = 1.0 + 0.1 * jax.random.normal(k3, (C2,), dtype=jnp.float32)
    b2 = 0.1 * jax.random.normal(k4, (C2,), dtype=jnp.float32)

    out2 = jax.block_until_ready(dsblock_forward(x2, w2, g2, b2))
    ref2 = dsblock_reference(x2, w2, g2, b2)
    assert jnp.allclose(out2, ref2, atol=2e-5, rtol=2e-5)

    # TODO(synk): BatchNorm2d running_mean/running_var buffer updates (training
    # side effect) are not produced; they do not affect the forward output.

    print("KERNEL_OK")
</pallas_src>

<mosaic_0001>
module attributes {stable_mosaic.version = 11 : i64} {
  func.func @dsblock_kernel(%arg0: i32, %arg1: i32, %arg2: i32, %arg3: i32, %arg4: memref<1x4x256xf32, #tpu.memory_space<vmem>>, %arg5: memref<4x1xf32, #tpu.memory_space<vmem>>, %arg6: memref<4x1xf32, #tpu.memory_space<vmem>>, %arg7: memref<1x4x256xf32, #tpu.memory_space<vmem>>, %arg8: memref<4x1xf32, #tpu.memory_space<vmem>>, %arg9: memref<4x1xf32, #tpu.memory_space<vmem>>) attributes {dimension_semantics = [#tpu.dimension_semantics<parallel>, #tpu.dimension_semantics<arbitrary>, #tpu.dimension_semantics<arbitrary>, #tpu.dimension_semantics<arbitrary>], iteration_bounds = array<i64: 1, 2, 2, 1>, scalar_prefetch = 0 : i64, scratch_operands = 2 : i64, tpu.core_type = #tpu.core_type<tc>, window_params = [{transform_indices = @transform_0, window_bounds = array<i64: 1, 4, 256>}, {transform_indices = @transform_1, window_bounds = array<i64: 4, 1>}, {transform_indices = @transform_2, window_bounds = array<i64: 4, 1>}, {transform_indices = @transform_3, window_bounds = array<i64: 1, 4, 256>}]} {
    %c0_i32 = arith.constant 0 : i32
    %0 = arith.cmpi eq, %arg1, %c0_i32 : i32
    %c0_i32_0 = arith.constant 0 : i32
    %1 = arith.cmpi eq, %arg2, %c0_i32_0 : i32
    %2 = arith.andi %0, %1 : i1
    %c0_i32_1 = arith.constant 0 : i32
    %3 = arith.cmpi eq, %arg3, %c0_i32_1 : i32
    %4 = arith.andi %2, %3 : i1
    %5 = arith.extui %4 : i1 to i32
    %c0_i32_2 = arith.constant 0 : i32
    %6 = arith.cmpi ne, %5, %c0_i32_2 : i32
    scf.if %6 {
      %cst = arith.constant 0.000000e+00 : f32
      %15 = vector.broadcast %cst : f32 to vector<4x1xf32>
      %c0_8 = arith.constant 0 : index
      %c0_9 = arith.constant 0 : index
      %16 = vector.load %arg8[%c0_8, %c0_9] : memref<4x1xf32, #tpu.memory_space<vmem>>, vector<4x1xf32>
      tpu.vector_store %arg8[%c0_8, %c0_9], %15 {strides = array<i32>} : memref<4x1xf32, #tpu.memory_space<vmem>>, vector<4x1xf32>,
      %cst_10 = arith.constant 0.000000e+00 : f32
      %17 = vector.broadcast %cst_10 : f32 to vector<4x1xf32>
      %c0_11 = arith.constant 0 : index
      %c0_12 = arith.constant 0 : index
      %18 = vector.load %arg9[%c0_11, %c0_12] : memref<4x1xf32, #tpu.memory_space<vmem>>, vector<4x1xf32>
      tpu.vector_store %arg9[%c0_11, %c0_12], %17 {strides = array<i32>} : memref<4x1xf32, #tpu.memory_space<vmem>>, vector<4x1xf32>,
    } else {
    }
    %c0 = arith.constant 0 : index
    %c0_3 = arith.constant 0 : index
    %c0_4 = arith.constant 0 : index
    %7 = vector.load %arg4[%c0, %c0_3, %c0_4] : memref<1x4x256xf32, #tpu.memory_space<vmem>>, vector<1x4x256xf32>
    %8 = vector.shape_cast %7 : vector<1x4x256xf32> to vector<4x256xf32>
    %c0_i32_5 = arith.constant 0 : i32
    %9 = arith.cmpi eq, %arg1, %c0_i32_5 : i32
    %10 = arith.extui %9 : i1 to i32
    %c0_i32_6 = arith.constant 0 : i32
    %11 = arith.cmpi ne, %10, %c0_i32_6 : i32
    scf.if %11 {
      %c0_8 = arith.constant 0 : index
      %c0_9 = arith.constant 0 : index
      %15 = vector.load %arg8[%c0_8, %c0_9] : memref<4x1xf32, #tpu.memory_space<vmem>>, vector<4x1xf32>
      %cst = arith.constant dense<0.000000e+00> : vector<4xf32>
      %16 = vector.multi_reduction <add>, %8, %cst [1] : vector<4x256xf32> to vector<4xf32>
      %17 = vector.shape_cast %16 : vector<4xf32> to vector<4x1xf32>
      %18 = arith.addf %15, %17 : vector<4x1xf32>
      %c0_10 = arith.constant 0 : index
      %c0_11 = arith.constant 0 : index
      %19 = vector.load %arg8[%c0_10, %c0_11] : memref<4x1xf32, #tpu.memory_space<vmem>>, vector<4x1xf32>
      tpu.vector_store %arg8[%c0_10, %c0_11], %18 {strides = array<i32>} : memref<4x1xf32, #tpu.memory_space<vmem>>, vector<4x1xf32>,
      %c0_12 = arith.constant 0 : index
      %c0_13 = arith.constant 0 : index
      %20 = vector.load %arg9[%c0_12, %c0_13] : memref<4x1xf32, #tpu.memory_space<vmem>>, vector<4x1xf32>
      %21 = arith.mulf %8, %8 : vector<4x256xf32>
      %cst_14 = arith.constant dense<0.000000e+00> : vector<4xf32>
      %22 = vector.multi_reduction <add>, %21, %cst_14 [1] : vector<4x256xf32> to vector<4xf32>
      %23 = vector.shape_cast %22 : vector<4xf32> to vector<4x1xf32>
      %24 = arith.addf %20, %23 : vector<4x1xf32>
      %c0_15 = arith.constant 0 : index
      %c0_16 = arith.constant 0 : index
      %25 = vector.load %arg9[%c0_15, %c0_16] : memref<4x1xf32, #tpu.memory_space<vmem>>, vector<4x1xf32>
      tpu.vector_store %arg9[%c0_15, %c0_16], %24 {strides = array<i32>} : memref<4x1xf32, #tpu.memory_space<vmem>>, vector<4x1xf32>,
    } else {
    }
    %c1_i32 = arith.constant 1 : i32
    %12 = arith.cmpi eq, %arg1, %c1_i32 : i32
    %13 = arith.extui %12 : i1 to i32
    %c0_i32_7 = arith.constant 0 : i32
    %14 = arith.cmpi ne, %13, %c0_i32_7 : i32
    scf.if %14 {
      %c0_8 = arith.constant 0 : index
      %c0_9 = arith.constant 0 : index
      %15 = vector.load %arg8[%c0_8, %c0_9] : memref<4x1xf32, #tpu.memory_space<vmem>>, vector<4x1xf32>
      %cst = arith.constant 0.001953125 : f32
      %16 = vector.broadcast %cst : f32 to vector<4x1xf32>
      %17 = arith.mulf %15, %16 : vector<4x1xf32>
      %c0_10 = arith.constant 0 : index
      %c0_11 = arith.constant 0 : index
      %18 = vector.load %arg9[%c0_10, %c0_11] : memref<4x1xf32, #tpu.memory_space<vmem>>, vector<4x1xf32>
      %cst_12 = arith.constant 0.001953125 : f32
      %19 = vector.broadcast %cst_12 : f32 to vector<4x1xf32>
      %20 = arith.mulf %18, %19 : vector<4x1xf32>
      %21 = arith.mulf %17, %17 : vector<4x1xf32>
      %22 = arith.subf %20, %21 : vector<4x1xf32>
      %cst_13 = arith.constant 0.000000e+00 : f32
      %23 = vector.broadcast %cst_13 : f32 to vector<4x1xf32>
      %24 = arith.maximumf %22, %23 : vector<4x1xf32>
      %cst_14 = arith.constant 9.99999974E-6 : f32
      %25 = vector.broadcast %cst_14 : f32 to vector<4x1xf32>
      %26 = arith.addf %24, %25 : vector<4x1xf32>
      %27 = math.rsqrt %26 : vector<4x1xf32>
      %c0_15 = arith.constant 0 : index
      %c0_16 = arith.constant 0 : index
      %28 = vector.load %arg5[%c0_15, %c0_16] : memref<4x1xf32, #tpu.memory_space<vmem>>, vector<4x1xf32>
      %29 = arith.mulf %27, %28 : vector<4x1xf32>
      %c0_17 = arith.constant 0 : index
      %c0_18 = arith.constant 0 : index
      %30 = vector.load %arg6[%c0_17, %c0_18] : memref<4x1xf32, #tpu.memory_space<vmem>>, vector<4x1xf32>
      %31 = arith.mulf %17, %29 : vector<4x1xf32>
      %32 = arith.subf %30, %31 : vector<4x1xf32>
      %33 = vector.broadcast %29 : vector<4x1xf32> to vector<4x256xf32>
      %34 = arith.mulf %8, %33 : vector<4x256xf32>
      %35 = vector.broadcast %32 : vector<4x1xf32> to vector<4x256xf32>
      %36 = arith.addf %34, %35 : vector<4x256xf32>
      %c0_19 = arith.constant 0 : index
      %c0_20 = arith.constant 0 : index
      %c0_21 = arith.constant 0 : index
      %37 = vector.load %arg7[%c0_19, %c0_20, %c0_21] : memref<1x4x256xf32, #tpu.memory_space<vmem>>, vector<1x4x256xf32>
      %38 = vector.shape_cast %37 : vector<1x4x256xf32> to vector<4x256xf32>
      %39 = vector.shape_cast %36 : vector<4x256xf32> to vector<1x4x256xf32>
      tpu.vector_store %arg7[%c0_19, %c0_20, %c0_21], %39 {strides = array<i32>} : memref<1x4x256xf32, #tpu.memory_space<vmem>>, vector<1x4x256xf32>,
    } else {
    }
    return
  }
  func.func @transform_0(%arg0: i32, %arg1: i32, %arg2: i32, %arg3: i32) -> (i32, i32, i32) {
    %c0_i32 = arith.constant 0 : i32
    return %arg2, %arg0, %arg3 : i32, i32, i32
  }
  func.func @transform_1(%arg0: i32, %arg1: i32, %arg2: i32, %arg3: i32) -> (i32, i32) {
    %c0_i32 = arith.constant 0 : i32
    %c0_i32_0 = arith.constant 0 : i32
    return %arg0, %c0_i32 : i32, i32
  }
  func.func @transform_2(%arg0: i32, %arg1: i32, %arg2: i32, %arg3: i32) -> (i32, i32) {
    %c0_i32 = arith.constant 0 : i32
    %c0_i32_0 = arith.constant 0 : i32
    return %arg0, %c0_i32 : i32, i32
  }
  func.func @transform_3(%arg0: i32, %arg1: i32, %arg2: i32, %arg3: i32) -> (i32, i32, i32) {
    %0 = arith.muli %arg2, %arg1 : i32
    %1 = arith.muli %arg3, %arg1 : i32
    %c0_i32 = arith.constant 0 : i32
    return %0, %arg0, %1 : i32, i32, i32
  }
}

</mosaic_0001>

<llo_original>
// kernel: tpu_custom_call.1
$region0: #{tpu_custom_call.1}
  #allocation0 [shape = 'u32[]', space=smem, size = 0x4, offset = 0x4, fixed_abs, tag = 'smem constant byte address 0x4 - core index']
  #allocation1 [shape = 'u32[144,128]{1,0:T(1,128)}', space=vmem, size = 0x12000, scoped, tag = 'internal scratch']
  #allocation2 [shape = 'f32[4,1]{1,0:T(4,128)}', space=vmem, size = 0x800, scoped, tag = 'scratch operand']
  #allocation3 [shape = 'f32[4,1]{1,0:T(4,128)}', space=vmem, size = 0x800, scoped, tag = 'scratch operand']
  %s0 = inlined_call_operand.hbm [shape: f32[2,4,256], index: 0, kind: input, shape index: {}]
  %s1 = inlined_call_operand.vmem [shape: f32[4,1], index: 1, kind: input, shape index: {}]
  %s2 = inlined_call_operand.vmem [shape: f32[4,1], index: 2, kind: input, shape index: {}]
  %s3 = inlined_call_operand.hbm [shape: f32[2,4,256], index: 3, kind: output, shape index: {}]
  %s4 = sld [smem:[#allocation0]]
  $region61: #{tpu_custom_call.1} parent=0
    _
  %s6 = ssub.s32 1, %s4
  %s7 = scalar_select 0, %s6, %s4
  $region1: #{tpu_custom_call.1} parent=0
    #allocation4 [shape = 'u8[8192]{0}', space=vmem, size = 0x2000, scoped, tag = 'input window, operand 0']
    #allocation5 [shape = 's32[2]{0}', space=sflag, size = 0x8, scoped, tag = 'scoped memory for tpu_custom_call.1']
    #allocation6 [shape = 's32[2]{0}', space=sflag, size = 0x8, scoped, tag = 'scoped memory for tpu_custom_call.1']
    #allocation7 [shape = 'u8[8192]{0}', space=vmem, size = 0x2000, scoped, tag = 'output window, operand 0']
    %8 = vsyncpa [#allocation5], 0
    %s9 = scalar_lea.sflag [#allocation5], 1
    %10 = vsyncpa %s9, 0
    %11 = vsyncpa [#allocation6], 0
    %s12 = scalar_lea.sflag [#allocation6], 1
    %13 = vsyncpa %s12, 0
    loop: start=0, step=1, limit=6
    $region2: #{tpu_custom_call.1} parent=1 // loop_pre_header
      _
    $region3: #{tpu_custom_call.1} parent=1 // loop_header
      %s15 = sphi 0, %s19
      %p16 = scmp.ge.s32.totalorder %s15, 6
      %s22 = sphi 0, %s48
      %s23 = sphi 0, %s44
      %s24 = sphi 0, %s40
      %s25 = sphi 0, %s36
      %s26 = sphi 0, %s22
      %s27 = sphi 0, %s23
      %s28 = sphi 0, %s24
      %s29 = sphi 0, %s25
      %s30 = sphi 0, %s26
      %s31 = sphi 0, %s27
      %s32 = sphi 0, %s28
      %s33 = sphi 0, %s29
      %s55 = sphi 0, %s57
      %s58 = sphi 0, %s55
      %s59 = sphi 0, %s58
      %s75 = sphi 0, %s59
      %s81 = sphi 0, %s83
      %s84 = sphi 0, %s81
      %s85 = sphi 0, %s84
      %s101 = sphi 0, %s85
      %s107 = sphi 0, %s109
      %s110 = sphi 0, %s107
      %s111 = sphi 0, %s110
      %s127 = sphi 0, %s111
      %s141 = sphi 0, %s143
      %s144 = sphi 0, %s141
      %s145 = sphi 0, %s144
      %s161 = sphi 0, %s145
    $region4: #{tpu_custom_call.1} parent=1 // loop_header_branch
      %18 = sbr.rel (%p16) target = $region8
    $region5: #{tpu_custom_call.1} parent=1 // loop_body
      %s20 = ssub.s32 %s15, 1
      %s21 = ssub.s32 %s15, 2
      %s34 = sadd.s32 1, %s25
      %p35 = scmp.ge.s32.totalorder %s34, 1
      %s36 = scalar_select %p35, 0, %s34
      %s37 = sadd.s32 1, %s24
      %s38 = scalar_select %p35, %s37, %s24
      %p39 = scmp.ge.s32.totalorder %s38, 2
      %s40 = scalar_select %p39, 0, %s38
      %s41 = sadd.s32 1, %s23
      %s42 = scalar_select %p39, %s41, %s23
      %p43 = scmp.ge.s32.totalorder %s42, 2
      %s44 = scalar_select %p43, 0, %s42
      %s45 = sadd.s32 1, %s22
      %s46 = scalar_select %p43, %s45, %s22
      %p47 = scmp.ge.s32.totalorder %s46, 1
      %s48 = scalar_select %p47, 0, %s46
      %s49 = ssub.s32 %s24, %s40
      %s50 = ssub.s32 %s22, %s48
      %s51 = sor.u32 %s49, %s50
      %s52 = ssub.s32 %s25, %s36
      %s53 = sor.u32 %s51, %s52
      %p54 = scmp.eq.s32.totalorder %s53, 0
      %s56 = sadd.s32 %s55, 1
      %s57 = scalar_select %p54, %s55, %s56
      %p60 = pneg %p54
      %p61 = scmp.eq.s32.totalorder %s15, 3
      %p62 = por %p60, %p61
      %p63 = scmp.ne.s32.totalorder %s55, %s58
      %p64 = scmp.eq.s32.totalorder %s15, 0
      %p65 = por %p63, %p64
      %p66 = scmp.ne.s32.totalorder %s55, %s58
      %p67 = scmp.eq.s32.totalorder %s20, 3
      %p68 = por %p66, %p67
      %p69 = scmp.ne.s32.totalorder %s58, %s59
      %p70 = scmp.eq.s32.totalorder %s20, 0
      %p71 = por %p69, %p70
      %p72 = scmp.ne.s32.totalorder %s58, %s59
      %p73 = scmp.eq.s32.totalorder %s21, 3
      %p74 = por %p72, %p73
      %p76 = scmp.ne.s32.totalorder %s59, %s75
      %p77 = scmp.eq.s32.totalorder %s21, 0
      %p78 = por %p76, %p77
      %s79 = ssub.s32 %s22, %s48
      %p80 = scmp.eq.s32.totalorder %s79, 0
      %s82 = sadd.s32 %s81, 1
      %s83 = scalar_select %p80, %s81, %s82
      %p86 = pneg %p80
      %p87 = scmp.eq.s32.totalorder %s15, 3
      %p88 = por %p86, %p87
      %p89 = scmp.ne.s32.totalorder %s81, %s84
      %p90 = scmp.eq.s32.totalorder %s15, 0
      %p91 = por %p89, %p90
      %p92 = scmp.ne.s32.totalorder %s81, %s84
      %p93 = scmp.eq.s32.totalorder %s20, 3
      %p94 = por %p92, %p93
      %p95 = scmp.ne.s32.totalorder %s84, %s85
      %p96 = scmp.eq.s32.totalorder %s20, 0
      %p97 = por %p95, %p96
      %p98 = scmp.ne.s32.totalorder %s84, %s85
      %p99 = scmp.eq.s32.totalorder %s21, 3
      %p100 = por %p98, %p99
      %p102 = scmp.ne.s32.totalorder %s85, %s101
      %p103 = scmp.eq.s32.totalorder %s21, 0
      %p104 = por %p102, %p103
      %s105 = ssub.s32 %s22, %s48
      %p106 = scmp.eq.s32.totalorder %s105, 0
      %s108 = sadd.s32 %s107, 1
      %s109 = scalar_select %p106, %s107, %s108
      %p112 = pneg %p106
      %p113 = scmp.eq.s32.totalorder %s15, 3
      %p114 = por %p112, %p113
      %p115 = scmp.ne.s32.totalorder %s107, %s110
      %p116 = scmp.eq.s32.totalorder %s15, 0
      %p117 = por %p115, %p116
      %p118 = scmp.ne.s32.totalorder %s107, %s110
      %p119 = scmp.eq.s32.totalorder %s20, 3
      %p120 = por %p118, %p119
      %p121 = scmp.ne.s32.totalorder %s110, %s111
      %p122 = scmp.eq.s32.totalorder %s20, 0
      %p123 = por %p121, %p122
      %p124 = scmp.ne.s32.totalorder %s110, %s111
      %p125 = scmp.eq.s32.totalorder %s21, 3
      %p126 = por %p124, %p125
      %p128 = scmp.ne.s32.totalorder %s111, %s127
      %p129 = scmp.eq.s32.totalorder %s21, 0
      %p130 = por %p128, %p129
      %s131 = smul.u32 %s24, %s23
      %s132 = smul.u32 %s25, %s23
      %s133 = smul.u32 %s40, %s44
      %s134 = smul.u32 %s36, %s44
      %s135 = ssub.s32 %s131, %s133
      %s136 = ssub.s32 %s22, %s48
      %s137 = sor.u32 %s135, %s136
      %s138 = ssub.s32 %s132, %s134
      %s139 = sor.u32 %s137, %s138
      %p140 = scmp.eq.s32.totalorder %s139, 0
      %s142 = sadd.s32 %s141, 1
      %s143 = scalar_select %p140, %s141, %s142
      %p146 = pneg %p140
      %p147 = scmp.eq.s32.totalorder %s15, 3
      %p148 = por %p146, %p147
      %p149 = scmp.ne.s32.totalorder %s141, %s144
      %p150 = scmp.eq.s32.totalorder %s15, 0
      %p151 = por %p149, %p150
      %p152 = scmp.ne.s32.totalorder %s141, %s144
      %p153 = scmp.eq.s32.totalorder %s20, 3
      %p154 = por %p152, %p153
      %p155 = scmp.ne.s32.totalorder %s144, %s145
      %p156 = scmp.eq.s32.totalorder %s20, 0
      %p157 = por %p155, %p156
      %p158 = scmp.ne.s32.totalorder %s144, %s145
      %p159 = scmp.eq.s32.totalorder %s21, 3
      %p160 = por %p158, %p159
      %p162 = scmp.ne.s32.totalorder %s145, %s161
      %p163 = scmp.eq.s32.totalorder %s21, 0
      %p164 = por %p162, %p163
      %p165 = scmp.le.s32.totalorder 1, %s15
      %p166 = scmp.lt.s32.totalorder %s15, 5
      %p167 = pnand %p165, %p166
      %p168 = pneg %p167
      // Predicated region
      $region9: #{tpu_custom_call.1} parent=5 // pred_check
        _
      $region10: #{tpu_custom_call.1} parent=5 // pred_check_branch
        %170 = sbr.rel (%p167) target = $region12
      $region11: #{tpu_custom_call.1} parent=5 // pred_region
        %s171 = ssub.s32 %s15, 1
        // Predicated region
        $region13: #{tpu_custom_call.1} parent=11 // pred_check
          %p172 = pneg %p97
        $region14: #{tpu_custom_call.1} parent=11 // pred_check_branch
          %174 = sbr.rel (%p172) target = $region16
        $region15: #{tpu_custom_call.1} parent=11 // pred_region
          %p175 = scmp.lt.s32.totalorder %s26, 0
          %s176 = scalar_select %p175, %s26, 0
          %s177 = smul.addr %s176, 4
          %s178 = scalar_lea.vmem %s1, %s177
        $region16: #{tpu_custom_call.1} parent=11 // pred_fallthru
          _
        // Predicated region
        $region17: #{tpu_custom_call.1} parent=11 // pred_check
          %p179 = pneg %p123
        $region18: #{tpu_custom_call.1} parent=11 // pred_check_branch
          %181 = sbr.rel (%p179) target = $region20
        $region19: #{tpu_custom_call.1} parent=11 // pred_region
          %p182 = scmp.lt.s32.totalorder %s26, 0
          %s183 = scalar_select %p182, %s26, 0
          %s184 = smul.addr %s183, 4
          %s185 = scalar_lea.vmem %s2, %s184
        $region20: #{tpu_custom_call.1} parent=11 // pred_fallthru
          _
      $region12: #{tpu_custom_call.1} parent=5 // pred_fallthru
        _
      %p186 = scmp.lt.s32.totalorder %s15, 4
      // Predicated region
      $region21: #{tpu_custom_call.1} parent=5 // pred_check
        %p187 = pneg %p186
      $region22: #{tpu_custom_call.1} parent=5 // pred_check_branch
        %189 = sbr.rel (%p187) target = $region24
      $region23: #{tpu_custom_call.1} parent=5 // pred_region
        // Predicated region
        $region25: #{tpu_custom_call.1} parent=23 // pred_check
          %p190 = pneg %p65
        $region26: #{tpu_custom_call.1} parent=23 // pred_check_branch
          %192 = sbr.rel (%p190) target = $region28
        $region27: #{tpu_custom_call.1} parent=23 // pred_region
          %s193 = sand.u32 %s55, 1
          %s194 = scalar_lea.sflag [#allocation5], %s193
          %s195 = sand.u32 %s55, 1
          %s196 = smul.addr %s195, 8
          %s197 = scalar_lea.vmem [#allocation4], %s196
          %s198 = smul.u32 2, %s25
          %s200 = ssub.s32 128, 128
          %201 = vsyncadd %s194, %s200
          %s202 = smul.addr %s22, 2
          %s203 = sadd.s32 %s198, %s202
          %s204 = smul.addr %s24, 2
          %s205 = sadd.s32 %s203, %s204
          %s206 = smul.addr %s205, 64
          %s207 = scalar_lea.hbm %s0, %s206
          %s209 = sshll.u32 %s197, 4
          %s210 = int_to_ptr.vmem [resolvable:$true] %s209
          %212 = dma.hbm_to_vmem [thread:$0]  %s207, 128, %s210, %s194
        $region28: #{tpu_custom_call.1} parent=23 // pred_fallthru
          _
      $region24: #{tpu_custom_call.1} parent=5 // pred_fallthru
        _
      %p213 = scmp.le.s32.totalorder 1, %s15
      %p214 = scmp.lt.s32.totalorder %s15, 5
      %p215 = pnand %p213, %p214
      %p216 = pneg %p215
      // Predicated region
      $region29: #{tpu_custom_call.1} parent=5 // pred_check
        _
      $region30: #{tpu_custom_call.1} parent=5 // pred_check_branch
        %218 = sbr.rel (%p215) target = $region32
      $region31: #{tpu_custom_call.1} parent=5 // pred_region
        %s219 = ssub.s32 %s15, 1
        %s220 = sand.u32 %s58, 1
        %s221 = scalar_lea.sflag [#allocation5], %s220
        %s222 = sand.u32 %s58, 1
        %s223 = smul.addr %s222, 8
        %s224 = scalar_lea.vmem [#allocation4], %s223
        // Predicated region
        $region33: #{tpu_custom_call.1} parent=31 // pred_check
          %p225 = pneg %p71
        $region34: #{tpu_custom_call.1} parent=31 // pred_check_branch
          %227 = sbr.rel (%p225) target = $region36
        $region35: #{tpu_custom_call.1} parent=31 // pred_region
          %228 = dma.done %s221, 128
        $region36: #{tpu_custom_call.1} parent=31 // pred_fallthru
          _
        %s229 = sand.u32 %s58, 1
        %s230 = scalar_lea.sflag [#allocation5], %s229
        %s231 = sand.u32 %s58, 1
        %s232 = smul.addr %s231, 8
        %s233 = scalar_lea.vmem [#allocation4], %s232
        %p234 = pneg %p71
        %p235 = pneg %p68
        %p236 = scmp.lt.s32.totalorder %s26, 0
        %s237 = scalar_select %p236, %s26, 0
        %s238 = smul.addr %s237, 4
        %s239 = scalar_lea.vmem %s1, %s238
        %p240 = pneg %p97
        %p241 = pneg %p94
        %p242 = scmp.lt.s32.totalorder %s26, 0
        %s243 = scalar_select %p242, %s26, 0
        %s244 = smul.addr %s243, 4
        %s245 = scalar_lea.vmem %s2, %s244
        %p246 = pneg %p123
        %p247 = pneg %p120
        %p248 = pneg %p157
        %p249 = pneg %p154
        %s250 = sand.u32 %s144, 1
        %s251 = scalar_lea.sflag [#allocation6], %s250
        %s252 = sand.u32 %s144, 1
        %s253 = smul.addr %s252, 8
        %s254 = scalar_lea.vmem [#allocation7], %s253
        %s255 = smul.u32 2, %s29
        %p256 = scmp.lt.s32.totalorder %s26, 0
        %s257 = scalar_select %p256, %s26, 0
        %s258 = smul.addr %s257, 4
        %s259 = scalar_lea.vmem %s1, %s258
        %p260 = scmp.lt.s32.totalorder %s26, 0
        %s261 = scalar_select %p260, %s26, 0
        %s262 = smul.addr %s261, 4
        %s263 = scalar_lea.vmem %s2, %s262
        %s264 = smul.u32 %s28, %s27
        %s265 = smul.u32 %s29, %s27
        %s266 = smul.u32 2, %s265
        %p267 = scmp.eq.s32.totalorder %s27, 0
        %p268 = scmp.eq.s32.totalorder %s28, 0
        %p269 = pnand %p267, %p268
        %p270 = pneg %p269
        %p271 = scmp.eq.s32.totalorder %s29, 0
        %p272 = pnand %p270, %p271
        %p273 = pneg %p272
        // Predicated region
        $region37: #{tpu_custom_call.1} parent=31 // pred_check
          _
        $region38: #{tpu_custom_call.1} parent=31 // pred_check_branch
          %275 = sbr.rel (%p272) target = $region40
        $region39: #{tpu_custom_call.1} parent=31 // pred_region
          %vm276 = vcmask 3072
          %277 = vst.msk [vmem:[#allocation2] sm:$0xf] %vm276, 0.0
          %278 = vst.msk [vmem:[#allocation3] sm:$0xf] %vm276, 0.0
        $region40: #{tpu_custom_call.1} parent=31 // pred_fallthru
          _
        %v279 = vld [vmem:[%s224] sm:$0xff]
        // Predicated region
        $region41: #{tpu_custom_call.1} parent=31 // pred_check
          %p280 = pneg %p267
        $region42: #{tpu_custom_call.1} parent=31 // pred_check_branch
          %282 = sbr.rel (%p280) target = $region44
        $region43: #{tpu_custom_call.1} parent=31 // pred_region
          %v283 = vld [vmem:[#allocation2] sm:$0xf]
          %v285 = vcombine.high %v279, %v279
          %vm287 = vcmask 1043456
          %v288 = vsel %vm287, %v279, 0.0
          %v289 = vsel %vm287, %v285, 0.0
          %v290 = vadd.f32 %v288, %v289
          %291 = vadd.xlane.f32.xlu0 %v290
          %v292 = vpop.xlane.xlu0 %291
          %v293 = vadd.f32 %v283, %v292
          %vm294 = vcmask 3072
          %295 = vst.msk [vmem:[#allocation2] sm:$0xf] %vm294, %v293
          %v296 = vld [vmem:[#allocation3] sm:$0xf]
          %v297 = vmul.f32 %v279, %v279
          %v299 = vcombine.high %v297, %v297
          %v301 = vsel %vm287, %v297, 0.0
          %v302 = vsel %vm287, %v299, 0.0
          %v303 = vadd.f32 %v301, %v302
          %304 = vadd.xlane.f32.xlu0 %v303
          %v305 = vpop.xlane.xlu0 %304
          %v306 = vadd.f32 %v296, %v305
          %307 = vst.msk [vmem:[#allocation3] sm:$0xf] %vm294, %v306
        $region44: #{tpu_custom_call.1} parent=31 // pred_fallthru
          _
        %p308 = scmp.eq.s32.totalorder %s27, 1
        // Predicated region
        $region45: #{tpu_custom_call.1} parent=31 // pred_check
          %p309 = pneg %p308
        $region46: #{tpu_custom_call.1} parent=31 // pred_check_branch
          %311 = sbr.rel (%p309) target = $region48
        $region47: #{tpu_custom_call.1} parent=31 // pred_region
          %v312 = vld [vmem:[#allocation2] sm:$0xf]
          %v313 = vmul.f32 %v312, 0.001953125
          %v314 = vld [vmem:[#allocation3] sm:$0xf]
          %v315 = vmul.f32 %v314, 0.001953125
          %v316 = vmul.f32 %v313, %v313
          %v317 = vsub.f32 %v315, %v316
          %v318 = vmax.f32 %v317, 0.0
          %v319 = vadd.f32 %v318, 1e-05
          %v320 = vrsqrt.pop %v319
          %v321 = vld [vmem:[%s259] sm:$0xf]
          %v322 = vmul.f32 %v320, %v321
          %v323 = vld [vmem:[%s263] sm:$0xf]
          %v324 = vmul.f32 %v313, %v322
          %v325 = vsub.f32 %v323, %v324
          %327 = vset.pattern.permute.xlu0 0
          %328 = vperm.xlu0 %327, %v322
          %v329 = vpop.permute.xlu0 %328
          %v331 = vunpack.c.l.s4 839922192
          %v332 = vunpack.c.0.s8 %v331
          %v333 = vlaneseq
          %v334 = vshrl.u32 %v333, 7
          %v335 = vsub.s32 %v332, %v334
          %v336 = vrot.slane %v329, %v335
          %v338 = vmul.f32 %v279, %v336
          %340 = vset.pattern.permute.xlu0 0
          %341 = vperm.xlu0 %340, %v325
          %v342 = vpop.permute.xlu0 %341
          %v344 = vunpack.c.l.s4 839922192
          %v345 = vunpack.c.0.s8 %v344
          %v346 = vlaneseq
          %v347 = vshrl.u32 %v346, 7
          %v348 = vsub.s32 %v345, %v347
          %v349 = vrot.slane %v342, %v348
          %v351 = vadd.f32 %v338, %v349
          %352 = vst [vmem:[%s254] sm:$0xff] %v351
        $region48: #{tpu_custom_call.1} parent=31 // pred_fallthru
          _
        %s353 = sand.u32 %s144, 1
        %s354 = scalar_lea.sflag [#allocation6], %s353
        %s355 = sand.u32 %s144, 1
        %s356 = smul.addr %s355, 8
        %s357 = scalar_lea.vmem [#allocation7], %s356
        // Predicated region
        $region49: #{tpu_custom_call.1} parent=31 // pred_check
          %p358 = pneg %p154
        $region50: #{tpu_custom_call.1} parent=31 // pred_check_branch
          %360 = sbr.rel (%p358) target = $region52
        $region51: #{tpu_custom_call.1} parent=31 // pred_region
          %s361 = smul.u32 %s28, %s27
          %s362 = smul.u32 %s29, %s27
          %s363 = smul.u32 2, %s362
          %s365 = ssub.s32 128, 128
          %366 = vsyncadd %s354, %s365
          %s367 = smul.addr %s26, 2
          %s368 = sadd.s32 %s363, %s367
          %s369 = smul.addr %s361, 2
          %s370 = sadd.s32 %s368, %s369
          %s371 = smul.addr %s370, 64
          %s372 = scalar_lea.hbm %s3, %s371
          %s374 = sshll.u32 %s357, 4
          %s375 = int_to_ptr.vmem [resolvable:$true] %s374
          %377 = dma.vmem_to_hbm [thread:$0]  %s375, 128, %s372, %s354
        $region52: #{tpu_custom_call.1} parent=31 // pred_fallthru
          _
      $region32: #{tpu_custom_call.1} parent=5 // pred_fallthru
        _
      %p378 = scmp.le.s32.totalorder 2, %s15
      // Predicated region
      $region53: #{tpu_custom_call.1} parent=5 // pred_check
        %p379 = pneg %p378
      $region54: #{tpu_custom_call.1} parent=5 // pred_check_branch
        %381 = sbr.rel (%p379) target = $region56
      $region55: #{tpu_custom_call.1} parent=5 // pred_region
        %s382 = ssub.s32 %s15, 2
        // Predicated region
        $region57: #{tpu_custom_call.1} parent=55 // pred_check
          %p383 = pneg %p160
        $region58: #{tpu_custom_call.1} parent=55 // pred_check_branch
          %385 = sbr.rel (%p383) target = $region60
        $region59: #{tpu_custom_call.1} parent=55 // pred_region
          %s386 = sand.u32 %s145, 1
          %s387 = scalar_lea.sflag [#allocation6], %s386
          %s388 = sand.u32 %s145, 1
          %s389 = smul.addr %s388, 8
          %s390 = scalar_lea.vmem [#allocation7], %s389
          %391 = dma.done %s387, 128
        $region60: #{tpu_custom_call.1} parent=55 // pred_fallthru
          _
      $region56: #{tpu_custom_call.1} parent=5 // pred_fallthru
        _
    $region6: #{tpu_custom_call.1} parent=1 // loop_footer
      %s19 = sadd.s32 1, %s15
    $region7: #{tpu_custom_call.1} parent=1 // loop_footer_branch
      %14 = sbr.rel target = $region3
    $region8: #{tpu_custom_call.1} parent=1 // loop_exit
      _
    %392 = vsyncpa [#allocation5], 1
    %s393 = scalar_lea.sflag [#allocation5], 1
    %394 = vsyncpa %s393, 1
    %395 = vsyncpa [#allocation6], 1
    %s396 = scalar_lea.sflag [#allocation6], 1
    %397 = vsyncpa %s396, 1

</llo_original>
